<compile_context>
chip_gen: v7x
topology: tpu7x:2x2x1
jax: 0.10.0
libtpu: 0.0.40
codegen_flags: <defaults>
</compile_context>

<pallas_src>
import functools

import jax
import jax.numpy as jnp
from jax.experimental import pallas as pl
from jax.experimental.pallas import tpu as pltpu


# ------------------------------------------------------------------------- #
# Hierarchy (static, small): leaves 0..3, internal nodes 4, 5, root -1.
# ------------------------------------------------------------------------- #
HIERARCHY = {4: [0, 1], 5: [2, 3], -1: [4, 5]}


def get_dim(hierar):
    if len(hierar) > 1:
        return min(k for k in hierar if k > 0)
    return len(hierar[-1])


def get_height(hierarchy, node=-1, heights=None):
    if heights is None:
        heights = {}
    if node not in hierarchy:
        heights[node] = 0
    else:
        for c in hierarchy[node]:
            get_height(hierarchy, c, heights)
        heights[node] = max(heights[c] for c in hierarchy[node]) + 1
    return heights


DIM = get_dim(HIERARCHY)                      # 4 leaves
N_NODES = DIM + len(HIERARCHY)                # concatenated [x, zeros(n_agg)]

LANE = 128
SUB = 8


def _pos(node):
    """Position of a node inside the concatenated inputs vector."""
    return node if node >= 0 else N_NODES + node


def _build_agg_order():
    """Aggregation nodes ordered by height (children before parents)."""
    heights = get_height(HIERARCHY)
    height_map = {}
    for k, v in heights.items():
        height_map.setdefault(v, []).append(k)
    order = []
    for h in range(1, max(height_map) + 1):
        for ag in height_map[h]:
            order.append((_pos(ag), [_pos(c) for c in HIERARCHY[ag]]))
    return order


AGG_ORDER = _build_agg_order()                # [(pos, [child_pos, ...]), ...]
N_AGG = len(AGG_ORDER)
MAX_C = max(len(ch) for _, ch in AGG_ORDER)
MAX_P = max(len(ch) * (len(ch) - 1) // 2 for _, ch in AGG_ORDER)
N_SINGLE = sum(len(ch) for _, ch in AGG_ORDER)
N_PAIR = sum(len(ch) * (len(ch) - 1) // 2 for _, ch in AGG_ORDER)

# Per-sample flop estimate for the folded formulation:
#   singles: mul+add each; pairs: max+mul+add each.
FLOPS_PER_SAMPLE = 2 * N_SINGLE + 3 * N_PAIR


# ------------------------------------------------------------------------- #
# Deterministic parameter init (mirrors HCI_2_add.__init__ + normalize()).
# ------------------------------------------------------------------------- #
def init_params(key):
    ws = jnp.zeros((N_AGG, MAX_C), jnp.float32)
    wmin = jnp.zeros((N_AGG, MAX_P), jnp.float32)
    wmax = jnp.zeros((N_AGG, MAX_P), jnp.float32)
    for a, (_, children) in enumerate(AGG_ORDER):
        c = len(children)
        p = c * (c - 1) // 2
        key, sub = jax.random.split(key)
        raw = jax.random.normal(sub, (c + 2 * p,), jnp.float32)
        w = jax.nn.softmax(raw)               # attention-style normalization
        ws = ws.at[a, :c].set(w[:c])
        wmin = wmin.at[a, :p].set(w[c:c + p])
        wmax = wmax.at[a, :p].set(w[c + p:])
    return ws, wmin, wmax


def fold_weights(ws, wmin, wmax):
    """Host-side algebraic fold: min(a,b) = a + b - max(a,b).

    Per node:  y = sum_i ws'[i]*x_i + sum_{i<j} (wmax-wmin)[ij]*max(x_i,x_j)
    with ws'[i] = ws[i] + sum over pairs containing i of wmin[pair].
    Returned flat (1-D) so the SMEM tables avoid 2-D padding.
    """
    singles = []
    pairs = []
    for a, (_, children) in enumerate(AGG_ORDER):
        c = len(children)
        eff = [ws[a, i] for i in range(c)]
        p = 0
        for i in range(c):
            for j in range(i + 1, c):
                eff[i] = eff[i] + wmin[a, p]
                eff[j] = eff[j] + wmin[a, p]
                pairs.append(wmax[a, p] - wmin[a, p])
                p += 1
        singles.extend(eff)
    w_single = jnp.stack(singles).astype(jnp.float32)      # (N_SINGLE,)
    w_pair = jnp.stack(pairs).astype(jnp.float32)           # (N_PAIR,)
    return w_single, w_pair


# ------------------------------------------------------------------------- #
# Pallas kernel: full hierarchical Choquet evaluation on one batch tile.
#   x_ref : (DIM, TR, 128) VMEM   -- leaf utilities, lane+sublane dense
#   ws_ref: (N_SINGLE,)   SMEM    -- folded singleton weights (flat)
#   wp_ref: (N_PAIR,)     SMEM    -- folded pair weights (wmax - wmin, flat)
#   o_ref : (TR, 128)     VMEM    -- root value per sample
# ------------------------------------------------------------------------- #
def neurhci_kernel(x_ref, ws_ref, wp_ref, o_ref):
    vals = {}
    for i in range(DIM):
        vals[i] = x_ref[i]                                 # identity leaf, (TR, 128)

    s_off = 0
    p_off = 0
    for node_pos, children in AGG_ORDER:
        vs = [vals[c] for c in children]
        acc = ws_ref[s_off] * vs[0]                        # singleton terms
        for i in range(1, len(vs)):
            acc = acc + ws_ref[s_off + i] * vs[i]
        s_off += len(vs)
        for i in range(len(vs)):                           # pairwise (max only)
            for j in range(i + 1, len(vs)):
                acc = acc + wp_ref[p_off] * jnp.maximum(vs[i], vs[j])
                p_off += 1
        vals[node_pos] = acc

    o_ref[...] = vals[AGG_ORDER[-1][0]]                    # root value, (TR, 128)


# ------------------------------------------------------------------------- #
# Low-level entry: batch already laid out as (DIM, rows, 128) tiles.
# Producers that can emit this layout directly should call this and skip the
# wrapper transpose (it costs an extra HBM pass on an HBM-bound kernel).
# ------------------------------------------------------------------------- #
def neurhci_forward_tiles(xt, w_single, w_pair, *, block_rows=2048):
    dim, rows, lane = xt.shape
    assert dim == DIM and lane == LANE
    assert rows % SUB == 0
    assert block_rows >= SUB and block_rows % SUB == 0

    tr = min(block_rows, rows)
    # Keep at least two grid steps when there is more than one (8,128) tile of
    # work, so a 2-TensorCore part (v7x) can shard the "parallel" grid axis.
    if tr == rows and rows > SUB:
        half = -(-rows // 2)
        tr = -(-half // SUB) * SUB

    num_blocks = -(-rows // tr)                            # partial last block OK

    # Double-buffered in+out blocks plus headroom for Mosaic internal scratch.
    block_bytes = (DIM + 1) * tr * LANE * 4
    vmem_limit = min(96 * 1024 * 1024,
                     max(32 * 1024 * 1024, 2 * block_bytes + (8 << 20)))

    cost = pl.CostEstimate(
        flops=FLOPS_PER_SAMPLE * rows * LANE,
        transcendentals=0,
        bytes_accessed=(DIM + 1) * rows * LANE * 4,
    )

    return pl.pallas_call(
        neurhci_kernel,
        out_shape=jax.ShapeDtypeStruct((rows, LANE), jnp.float32),
        grid=(num_blocks,),
        in_specs=[
            pl.BlockSpec((DIM, tr, LANE), lambda i: (0, i, 0)),
            pl.BlockSpec(memory_space=pltpu.MemorySpace.SMEM),
            pl.BlockSpec(memory_space=pltpu.MemorySpace.SMEM),
        ],
        out_specs=pl.BlockSpec((tr, LANE), lambda i: (i, 0)),
        compiler_params=pltpu.CompilerParams(
            dimension_semantics=("parallel",),
            vmem_limit_bytes=vmem_limit,
        ),
        cost_estimate=cost,
    )(xt, w_single, w_pair)


# ------------------------------------------------------------------------- #
# Public wrapper: (B, DIM) -> (B,).  Pads batch to whole (8,128) tiles only
# (no rounding to the grid tile) and relayouts to (DIM, rows, 128).
# ------------------------------------------------------------------------- #
@functools.partial(jax.jit, static_argnames=("block_rows",))
def neurhci_forward(x, w_single, w_pair, block_rows=2048):
    B, d = x.shape
    assert d == DIM

    rows = -(-B // LANE)                       # 128-wide lane groups
    rows = -(-rows // SUB) * SUB               # pad only to a whole (8,128) tile
    b_pad = rows * LANE

    xp = jnp.pad(x.astype(jnp.float32), ((0, b_pad - B), (0, 0)))
    # TODO(synk): producers that can emit (DIM, rows, 128) directly should call
    # neurhci_forward_tiles and skip this transpose (an extra HBM pass roughly
    # equal to the kernel's own input traffic).
    xt = xp.T.reshape(DIM, rows, LANE)

    out = neurhci_forward_tiles(xt, w_single, w_pair, block_rows=block_rows)
    return out.reshape(b_pad)[:B]


# ------------------------------------------------------------------------- #
# Pure-JAX reference (original, un-folded formulation — same as PyTorch forward).
# ------------------------------------------------------------------------- #
def neurhci_ref(x, ws, wmin, wmax):
    vals = {i: x[:, i] for i in range(DIM)}
    for a, (node_pos, children) in enumerate(AGG_ORDER):
        vs = [vals[c] for c in children]
        acc = jnp.zeros_like(vs[0])
        for i in range(len(vs)):
            acc = acc + ws[a, i] * vs[i]
        p = 0
        for i in range(len(vs)):
            for j in range(i + 1, len(vs)):
                acc = acc + wmin[a, p] * jnp.minimum(vs[i], vs[j])
                acc = acc + wmax[a, p] * jnp.maximum(vs[i], vs[j])
                p += 1
        vals[node_pos] = acc
    return vals[AGG_ORDER[-1][0]]


if __name__ == "__main__":
    key = jax.random.PRNGKey(0)
    key, kx = jax.random.split(key)

    ws, wmin, wmax = init_params(key)
    w_single, w_pair = fold_weights(ws, wmin, wmax)

    # Small batch (single grid step, single (8,128) tile).
    B = 8
    x = jax.random.uniform(kx, (B, DIM), jnp.float32)      # utilities in [0, 1]
    y = neurhci_forward(x, w_single, w_pair)
    jax.block_until_ready(y)
    y_ref = neurhci_ref(x, ws, wmin, wmax)
    assert y.shape == (B,)
    assert jnp.allclose(y, y_ref, atol=1e-5, rtol=1e-5), (y, y_ref)

    # Ragged batch: exercises the >=2-step grid split (v7x megacore heuristic)
    # and the partial last block (rows not a multiple of the tile).
    B2 = 2048 + 17
    x2 = jax.random.uniform(jax.random.PRNGKey(1), (B2, DIM), jnp.float32)
    y2 = neurhci_forward(x2, w_single, w_pair)
    jax.block_until_ready(y2)
    y2_ref = neurhci_ref(x2, ws, wmin, wmax)
    assert y2.shape == (B2,)
    assert jnp.allclose(y2, y2_ref, atol=1e-5, rtol=1e-5), (y2, y2_ref)

    # Same batch with a tiny tile: exercises a multi-block (>2 step) pipeline.
    y3 = neurhci_forward(x2, w_single, w_pair, block_rows=8)
    jax.block_until_ready(y3)
    assert jnp.allclose(y3, y2_ref, atol=1e-5, rtol=1e-5), (y3, y2_ref)

    print("KERNEL_OK")
</pallas_src>

<mosaic_0001>
module attributes {stable_mosaic.version = 11 : i64} {
  func.func @neurhci_kernel(%arg0: i32, %arg1: memref<4x8x128xf32, #tpu.memory_space<vmem>>, %arg2: memref<6xf32, #tpu.memory_space<smem>>, %arg3: memref<3xf32, #tpu.memory_space<smem>>, %arg4: memref<8x128xf32, #tpu.memory_space<vmem>>) attributes {dimension_semantics = [#tpu.dimension_semantics<parallel>], iteration_bounds = array<i64: 1>, scalar_prefetch = 0 : i64, scratch_operands = 0 : i64, tpu.core_type = #tpu.core_type<tc>, window_params = [{transform_indices = @transform_0, window_bounds = array<i64: 4, 8, 128>}, {transform_indices = @transform_1, window_bounds = array<i64: 6>}, {transform_indices = @transform_2, window_bounds = array<i64: 3>}, {transform_indices = @transform_3, window_bounds = array<i64: 8, 128>}]} {
    %c0 = arith.constant 0 : index
    %c0_0 = arith.constant 0 : index
    %c0_1 = arith.constant 0 : index
    %0 = vector.load %arg1[%c0, %c0_0, %c0_1] : memref<4x8x128xf32, #tpu.memory_space<vmem>>, vector<1x8x128xf32>
    %1 = vector.shape_cast %0 : vector<1x8x128xf32> to vector<8x128xf32>
    %c1 = arith.constant 1 : index
    %c0_2 = arith.constant 0 : index
    %c0_3 = arith.constant 0 : index
    %2 = vector.load %arg1[%c1, %c0_2, %c0_3] : memref<4x8x128xf32, #tpu.memory_space<vmem>>, vector<1x8x128xf32>
    %3 = vector.shape_cast %2 : vector<1x8x128xf32> to vector<8x128xf32>
    %c2 = arith.constant 2 : index
    %c0_4 = arith.constant 0 : index
    %c0_5 = arith.constant 0 : index
    %4 = vector.load %arg1[%c2, %c0_4, %c0_5] : memref<4x8x128xf32, #tpu.memory_space<vmem>>, vector<1x8x128xf32>
    %5 = vector.shape_cast %4 : vector<1x8x128xf32> to vector<8x128xf32>
    %c3 = arith.constant 3 : index
    %c0_6 = arith.constant 0 : index
    %c0_7 = arith.constant 0 : index
    %6 = vector.load %arg1[%c3, %c0_6, %c0_7] : memref<4x8x128xf32, #tpu.memory_space<vmem>>, vector<1x8x128xf32>
    %7 = vector.shape_cast %6 : vector<1x8x128xf32> to vector<8x128xf32>
    %c0_8 = arith.constant 0 : index
    %8 = memref.load %arg2[%c0_8] : memref<6xf32, #tpu.memory_space<smem>>
    %9 = vector.broadcast %8 : f32 to vector<8x128xf32>
    %10 = arith.mulf %9, %1 : vector<8x128xf32>
    %c1_9 = arith.constant 1 : index
    %11 = memref.load %arg2[%c1_9] : memref<6xf32, #tpu.memory_space<smem>>
    %12 = vector.broadcast %11 : f32 to vector<8x128xf32>
    %13 = arith.mulf %12, %3 : vector<8x128xf32>
    %14 = arith.addf %10, %13 : vector<8x128xf32>
    %c0_10 = arith.constant 0 : index
    %15 = memref.load %arg3[%c0_10] : memref<3xf32, #tpu.memory_space<smem>>
    %16 = arith.maximumf %1, %3 : vector<8x128xf32>
    %17 = vector.broadcast %15 : f32 to vector<8x128xf32>
    %18 = arith.mulf %17, %16 : vector<8x128xf32>
    %19 = arith.addf %14, %18 : vector<8x128xf32>
    %c2_11 = arith.constant 2 : index
    %20 = memref.load %arg2[%c2_11] : memref<6xf32, #tpu.memory_space<smem>>
    %21 = vector.broadcast %20 : f32 to vector<8x128xf32>
    %22 = arith.mulf %21, %5 : vector<8x128xf32>
    %c3_12 = arith.constant 3 : index
    %23 = memref.load %arg2[%c3_12] : memref<6xf32, #tpu.memory_space<smem>>
    %24 = vector.broadcast %23 : f32 to vector<8x128xf32>
    %25 = arith.mulf %24, %7 : vector<8x128xf32>
    %26 = arith.addf %22, %25 : vector<8x128xf32>
    %c1_13 = arith.constant 1 : index
    %27 = memref.load %arg3[%c1_13] : memref<3xf32, #tpu.memory_space<smem>>
    %28 = arith.maximumf %5, %7 : vector<8x128xf32>
    %29 = vector.broadcast %27 : f32 to vector<8x128xf32>
    %30 = arith.mulf %29, %28 : vector<8x128xf32>
    %31 = arith.addf %26, %30 : vector<8x128xf32>
    %c4 = arith.constant 4 : index
    %32 = memref.load %arg2[%c4] : memref<6xf32, #tpu.memory_space<smem>>
    %33 = vector.broadcast %32 : f32 to vector<8x128xf32>
    %34 = arith.mulf %33, %19 : vector<8x128xf32>
    %c5 = arith.constant 5 : index
    %35 = memref.load %arg2[%c5] : memref<6xf32, #tpu.memory_space<smem>>
    %36 = vector.broadcast %35 : f32 to vector<8x128xf32>
    %37 = arith.mulf %36, %31 : vector<8x128xf32>
    %38 = arith.addf %34, %37 : vector<8x128xf32>
    %c2_14 = arith.constant 2 : index
    %39 = memref.load %arg3[%c2_14] : memref<3xf32, #tpu.memory_space<smem>>
    %40 = arith.maximumf %19, %31 : vector<8x128xf32>
    %41 = vector.broadcast %39 : f32 to vector<8x128xf32>
    %42 = arith.mulf %41, %40 : vector<8x128xf32>
    %43 = arith.addf %38, %42 : vector<8x128xf32>
    %c0_15 = arith.constant 0 : index
    %c0_16 = arith.constant 0 : index
    %44 = vector.load %arg4[%c0_15, %c0_16] : memref<8x128xf32, #tpu.memory_space<vmem>>, vector<8x128xf32>
    tpu.vector_store %arg4[%c0_15, %c0_16], %43 {strides = array<i32>} : memref<8x128xf32, #tpu.memory_space<vmem>>, vector<8x128xf32>,
    return
  }
  func.func @transform_0(%arg0: i32) -> (i32, i32, i32) {
    %c0_i32 = arith.constant 0 : i32
    %c0_i32_0 = arith.constant 0 : i32
    %c0_i32_1 = arith.constant 0 : i32
    return %c0_i32, %arg0, %c0_i32_0 : i32, i32, i32
  }
  func.func @transform_1(%arg0: i32) -> i32 {
    %c0_i32 = arith.constant 0 : i32
    %c0_i32_0 = arith.constant 0 : i32
    return %c0_i32 : i32
  }
  func.func @transform_2(%arg0: i32) -> i32 {
    %c0_i32 = arith.constant 0 : i32
    %c0_i32_0 = arith.constant 0 : i32
    return %c0_i32 : i32
  }
  func.func @transform_3(%arg0: i32) -> (i32, i32) {
    %c0_i32 = arith.constant 0 : i32
    %c0_i32_0 = arith.constant 0 : i32
    return %arg0, %c0_i32 : i32, i32
  }
}

</mosaic_0001>

<llo_original>
// kernel: neurhci_forward.1
$region0: #{neurhci_forward.1}
  #allocation0 [shape = 'u32[]', space=smem, size = 0x4, offset = 0x4, fixed_abs, tag = 'smem constant byte address 0x4 - core index']
  #allocation1 [shape = 'u32[144,128]{1,0:T(1,128)}', space=vmem, size = 0x12000, scoped, tag = 'internal scratch']
  %s0 = inlined_call_operand.vmem [shape: f32[4,8,128], index: 0, kind: input, shape index: {}]
  %s1 = inlined_call_operand.vmem [shape: f32[6], index: 1, kind: input, shape index: {}]
  %s2 = inlined_call_operand.vmem [shape: f32[3], index: 2, kind: input, shape index: {}]
  %s3 = inlined_call_operand.vmem [shape: f32[8,128], index: 3, kind: output, shape index: {}]
  %s4 = sld [smem:[#allocation0]]
  $region30: #{neurhci_forward.1} parent=0
    _
  %s6 = ssub.s32 1, %s4
  %s7 = scalar_select 0, %s6, %s4
  $region1: #{neurhci_forward.1} parent=0
    #allocation2 [shape = 'u8[512]{0}', space=smem, size = 0x200, scoped, tag = 'input window, operand 1, single buffered']
    #allocation3 [shape = 's32[1]{0}', space=sflag, size = 0x4, scoped, tag = 'scoped memory for neurhci_forward.1']
    #allocation4 [shape = 'u8[512]{0}', space=smem, size = 0x200, scoped, tag = 'input window, operand 2, single buffered']
    #allocation5 [shape = 's32[1]{0}', space=sflag, size = 0x4, scoped, tag = 'scoped memory for neurhci_forward.1']
    %8 = vsyncpa [#allocation3], 0
    %9 = vsyncpa [#allocation5], 0
    // Predicated region
    $region2: #{neurhci_forward.1} parent=1 // pred_check
      _
    $region3: #{neurhci_forward.1} parent=1 // pred_check_branch
      %11 = sbr.rel (0) target = $region5
    $region4: #{neurhci_forward.1} parent=1 // pred_region
      _
    $region5: #{neurhci_forward.1} parent=1 // pred_fallthru
      _
    // Predicated region
    $region6: #{neurhci_forward.1} parent=1 // pred_check
      _
    $region7: #{neurhci_forward.1} parent=1 // pred_check_branch
      %13 = sbr.rel (0) target = $region9
    $region8: #{neurhci_forward.1} parent=1 // pred_region
      %s15 = ssub.s32 16, 16
      %16 = vsyncadd [#allocation3], %s15
      %s18 = sshll.u32 %s1, 4
      %s19 = int_to_ptr.vmem [resolvable:$true] %s18
      %21 = dma.vmem_to_smem %s19, 16, [#allocation2], [#allocation3]
    $region9: #{neurhci_forward.1} parent=1 // pred_fallthru
      _
    // Predicated region
    $region10: #{neurhci_forward.1} parent=1 // pred_check
      _
    $region11: #{neurhci_forward.1} parent=1 // pred_check_branch
      %23 = sbr.rel (0) target = $region13
    $region12: #{neurhci_forward.1} parent=1 // pred_region
      %s25 = ssub.s32 16, 16
      %26 = vsyncadd [#allocation5], %s25
      %s28 = sshll.u32 %s2, 4
      %s29 = int_to_ptr.vmem [resolvable:$true] %s28
      %31 = dma.vmem_to_smem %s29, 16, [#allocation4], [#allocation5]
    $region13: #{neurhci_forward.1} parent=1 // pred_fallthru
      _
    // Predicated region
    $region14: #{neurhci_forward.1} parent=1 // pred_check
      _
    $region15: #{neurhci_forward.1} parent=1 // pred_check_branch
      %33 = sbr.rel (0) target = $region17
    $region16: #{neurhci_forward.1} parent=1 // pred_region
      %34 = dma.done [#allocation3], 16
    $region17: #{neurhci_forward.1} parent=1 // pred_fallthru
      _
    // Predicated region
    $region18: #{neurhci_forward.1} parent=1 // pred_check
      _
    $region19: #{neurhci_forward.1} parent=1 // pred_check_branch
      %36 = sbr.rel (0) target = $region21
    $region20: #{neurhci_forward.1} parent=1 // pred_region
      %37 = dma.done [#allocation5], 16
    $region21: #{neurhci_forward.1} parent=1 // pred_fallthru
      _
    %38 = sfence
    %v39 = vld [vmem:[%s0] sm:$0xff]
    %s40 = scalar_lea.vmem %s0, 8
    %v41 = vld [vmem:[%s40] sm:$0xff]
    %s42 = scalar_lea.vmem %s0, 16
    %v43 = vld [vmem:[%s42] sm:$0xff]
    %s44 = scalar_lea.vmem %s0, 24
    %v45 = vld [vmem:[%s44] sm:$0xff]
    %s46 = sld [smem:[#allocation2]]
    %v47 = vstv %s46
    %v48 = vmul.f32 %v47, %v39
    %s49 = sld [smem:[#allocation2 + $0x1]]
    %v50 = vstv %s49
    %v51 = vmul.f32 %v50, %v41
    %v52 = vadd.f32 %v48, %v51
    %s53 = sld [smem:[#allocation4]]
    %v54 = vmax.f32 %v39, %v41
    %v55 = vstv %s53
    %v56 = vmul.f32 %v55, %v54
    %v57 = vadd.f32 %v52, %v56
    %s58 = sld [smem:[#allocation2 + $0x2]]
    %v59 = vstv %s58
    %v60 = vmul.f32 %v59, %v43
    %s61 = sld [smem:[#allocation2 + $0x3]]
    %v62 = vstv %s61
    %v63 = vmul.f32 %v62, %v45
    %v64 = vadd.f32 %v60, %v63
    %s65 = sld [smem:[#allocation4 + $0x1]]
    %v66 = vmax.f32 %v43, %v45
    %v67 = vstv %s65
    %v68 = vmul.f32 %v67, %v66
    %v69 = vadd.f32 %v64, %v68
    %s70 = sld [smem:[#allocation2 + $0x4]]
    %v71 = vstv %s70
    %v72 = vmul.f32 %v71, %v57
    %s73 = sld [smem:[#allocation2 + $0x5]]
    %v74 = vstv %s73
    %v75 = vmul.f32 %v74, %v69
    %v76 = vadd.f32 %v72, %v75
    %s77 = sld [smem:[#allocation4 + $0x2]]
    %v78 = vmax.f32 %v57, %v69
    %v79 = vstv %s77
    %v80 = vmul.f32 %v79, %v78
    %v81 = vadd.f32 %v76, %v80
    %82 = vst [vmem:[%s3] sm:$0xff] %v81
    // Predicated region
    $region22: #{neurhci_forward.1} parent=1 // pred_check
      _
    $region23: #{neurhci_forward.1} parent=1 // pred_check_branch
      %84 = sbr.rel (0) target = $region25
    $region24: #{neurhci_forward.1} parent=1 // pred_region
      _
    $region25: #{neurhci_forward.1} parent=1 // pred_fallthru
      _
    // Predicated region
    $region26: #{neurhci_forward.1} parent=1 // pred_check
      _
    $region27: #{neurhci_forward.1} parent=1 // pred_check_branch
      %86 = sbr.rel (0) target = $region29
    $region28: #{neurhci_forward.1} parent=1 // pred_region
      _
    $region29: #{neurhci_forward.1} parent=1 // pred_fallthru
      _
    %87 = vsyncpa [#allocation3], 1
    %88 = vsyncpa [#allocation5], 1

</llo_original>
